<compile_context>
chip_gen: v7x
topology: tpu7x:2x2x1
jax: 0.10.0
libtpu: 0.0.40
codegen_flags: <defaults>
</compile_context>

<pallas_src>
import functools
import math

import numpy as np
import jax
import jax.numpy as jnp
from jax.experimental import pallas as pl
from jax.experimental.pallas import tpu as pltpu


def _bert_attention_kernel(xq_ref, xkv_ref, mask_ref,
                           wq_ref, bq_ref, wk_ref, bk_ref, wv_ref, bv_ref,
                           wo_ref, bo_ref, gamma_ref, beta_ref,
                           out_ref, acc_ref, *, scale, eps):
    h = pl.program_id(2)

    @pl.when(h == 0)
    def _():
        acc_ref[...] = jnp.zeros_like(acc_ref)

    xq = xq_ref[0]                               # (tq, D)  original precision (residual)
    xq_b = xq.astype(jnp.bfloat16)               # MXU operand
    xkv_b = xkv_ref[0].astype(jnp.bfloat16)      # (L, D)   MXU operand

    # ---- per-head Q/K/V projections: contraction K = D (full MXU depth), f32 accumulate
    q = jnp.dot(xq_b, wq_ref[0], preferred_element_type=jnp.float32) + bq_ref[0]   # (tq, hd)
    q = q * scale                                # fold softmax scale into Q once
    k = jnp.dot(xkv_b, wk_ref[0], preferred_element_type=jnp.float32) + bk_ref[0]  # (L, hd)
    v = jnp.dot(xkv_b, wv_ref[0], preferred_element_type=jnp.float32) + bv_ref[0]  # (L, hd)

    # ---- additive mask bias: (1 - mask) * -10000, broadcast over query rows
    mask_bias = (1.0 - mask_ref[0].astype(jnp.float32)) * (-10000.0)                # (1, L)

    # ---- scores / softmax (f32 math, bf16 MXU operands), no explicit transpose
    s = jax.lax.dot_general(q.astype(jnp.bfloat16), k.astype(jnp.bfloat16),
                            (((1,), (1,)), ((), ())),
                            preferred_element_type=jnp.float32)                     # (tq, L)
    s = s + mask_bias
    s = s - jnp.max(s, axis=-1, keepdims=True)
    e = jnp.exp(s)
    p = e * pl.reciprocal(jnp.sum(e, axis=-1, keepdims=True), approx=True)          # EUP divide

    ctx = jnp.dot(p.astype(jnp.bfloat16), v.astype(jnp.bfloat16),
                  preferred_element_type=jnp.float32)                                # (tq, hd)

    # ---- output projection folded per head:  concat(heads) @ Wo == sum_h ctx_h @ Wo_h
    acc_ref[...] += jnp.dot(ctx.astype(jnp.bfloat16), wo_ref[0],
                            preferred_element_type=jnp.float32)                      # (tq, D)

    # ---- BertSelfOutput on the last head: dense bias + residual + LayerNorm
    @pl.when(h == pl.num_programs(2) - 1)
    def _():
        hs = acc_ref[...] + bo_ref[...] + xq.astype(jnp.float32)
        mu = jnp.mean(hs, axis=-1, keepdims=True)
        var = jnp.mean(jnp.square(hs - mu), axis=-1, keepdims=True)
        norm = (hs - mu) * jax.lax.rsqrt(var + eps)
        out_ref[0] = (norm * gamma_ref[...] + beta_ref[...]).astype(out_ref.dtype)


def prepare_bert_attention_params(params, num_heads):
    """Pre-split weights per head and cast MXU operands to bf16.

    Do this ONCE (outside the hot loop); it avoids re-casting / re-laying-out the weights on
    every call, which would double the weight HBM traffic.
    """
    wq, bq, wk, bk, wv, bv, wo, bo, gamma, beta = params
    D = wq.shape[0]
    assert D % num_heads == 0
    hd = D // num_heads

    def split_in(w):    # (D, D) -> (H, D, hd), bf16 MXU operand
        return jnp.transpose(w.reshape(D, num_heads, hd), (1, 0, 2)).astype(jnp.bfloat16)

    def split_bias(b):  # (D,) -> (H, 1, hd), f32 (added after f32 accumulate)
        return b.reshape(num_heads, 1, hd).astype(jnp.float32)

    row = lambda a: a.reshape(1, D).astype(jnp.float32)
    return dict(
        wq=split_in(wq), bq=split_bias(bq),
        wk=split_in(wk), bk=split_bias(bk),
        wv=split_in(wv), bv=split_bias(bv),
        wo=wo.reshape(num_heads, hd, D).astype(jnp.bfloat16),   # (H, hd, D)
        bo=row(bo), gamma=row(gamma), beta=row(beta),
    )


def bert_attention_pallas(x, attention_mask, prepared, *, num_heads, eps=1e-5, q_tile=256):
    """x: (N, L, D); attention_mask: (N, L) or None; prepared: prepare_bert_attention_params()."""
    N, L, D = x.shape
    assert D % num_heads == 0
    hd = D // num_heads
    H = num_heads

    if attention_mask is None:
        attention_mask = jnp.ones((N, L), dtype=jnp.float32)
    mask3 = attention_mask.reshape(N, 1, L).astype(jnp.float32)

    # query tiling (v7x: more grid steps, bounded (tq, L) score tile); fall back to full L
    tq = q_tile if (q_tile is not None and q_tile <= L and L % q_tile == 0) else L
    num_q = L // tq

    kernel = functools.partial(_bert_attention_kernel,
                               scale=1.0 / math.sqrt(hd), eps=eps)

    in_specs = [
        pl.BlockSpec((1, tq, D), lambda n, i, h: (n, i, 0)),   # x  (query rows of this tile)
        pl.BlockSpec((1, L, D),  lambda n, i, h: (n, 0, 0)),   # x  (full rows for K/V)
        pl.BlockSpec((1, 1, L),  lambda n, i, h: (n, 0, 0)),   # mask
        pl.BlockSpec((1, D, hd), lambda n, i, h: (h, 0, 0)),   # Wq_h
        pl.BlockSpec((1, 1, hd), lambda n, i, h: (h, 0, 0)),   # bq_h
        pl.BlockSpec((1, D, hd), lambda n, i, h: (h, 0, 0)),   # Wk_h
        pl.BlockSpec((1, 1, hd), lambda n, i, h: (h, 0, 0)),   # bk_h
        pl.BlockSpec((1, D, hd), lambda n, i, h: (h, 0, 0)),   # Wv_h
        pl.BlockSpec((1, 1, hd), lambda n, i, h: (h, 0, 0)),   # bv_h
        pl.BlockSpec((1, hd, D), lambda n, i, h: (h, 0, 0)),   # Wo_h
        pl.BlockSpec((1, D),     lambda n, i, h: (0, 0)),      # bo     (VMEM-resident)
        pl.BlockSpec((1, D),     lambda n, i, h: (0, 0)),      # gamma  (VMEM-resident)
        pl.BlockSpec((1, D),     lambda n, i, h: (0, 0)),      # beta   (VMEM-resident)
    ]
    out_spec = pl.BlockSpec((1, tq, D), lambda n, i, h: (n, i, 0))

    # advisory cost estimate for XLA's scheduler
    flops = int(N * (8 * L * D * D + 4 * L * L * D))
    transcendentals = int(N * H * L * L)
    bytes_accessed = int(3 * N * L * D * x.dtype.itemsize     # x (q + kv reads) + out
                         + 4 * D * D * 2                      # bf16 weights
                         + N * L * 4 + 7 * D * 4)             # mask + biases/LN params

    return pl.pallas_call(
        kernel,
        out_shape=jax.ShapeDtypeStruct((N, L, D), x.dtype),
        grid=(N, num_q, H),
        in_specs=in_specs,
        out_specs=out_spec,
        scratch_shapes=[pltpu.VMEM((tq, D), jnp.float32)],     # per-tile output accumulator
        compiler_params=pltpu.CompilerParams(
            dimension_semantics=("parallel", "parallel", "arbitrary"),
            vmem_limit_bytes=48 * 1024 * 1024),                # explicit budget (v7x: 64 MiB phys)
        cost_estimate=pl.CostEstimate(flops=flops,
                                      transcendentals=transcendentals,
                                      bytes_accessed=bytes_accessed),
    )(x, x, mask3,
      prepared["wq"], prepared["bq"],
      prepared["wk"], prepared["bk"],
      prepared["wv"], prepared["bv"],
      prepared["wo"], prepared["bo"], prepared["gamma"], prepared["beta"])


def _reference(x, mask, params, num_heads, eps=1e-5):
    """Pure NumPy float64 replica of the PyTorch forward (dropout = identity)."""
    x = np.asarray(x, np.float64)
    mask = np.asarray(mask, np.float64)
    wq, bq, wk, bk, wv, bv, wo, bo, g, b = [np.asarray(p, np.float64) for p in params]
    N, L, D = x.shape
    hd = D // num_heads
    out = np.zeros_like(x)
    for n in range(N):
        q = x[n] @ wq + bq
        k = x[n] @ wk + bk
        v = x[n] @ wv + bv
        bias = (1.0 - mask[n]) * (-10000.0)           # (L,)
        ctx = np.zeros((L, D))
        for h in range(num_heads):
            sl = slice(h * hd, (h + 1) * hd)
            s = (q[:, sl] @ k[:, sl].T) / math.sqrt(hd) + bias[None, :]
            s = s - s.max(axis=-1, keepdims=True)
            e = np.exp(s)
            p = e / e.sum(axis=-1, keepdims=True)
            ctx[:, sl] = p @ v[:, sl]
        hsd = ctx @ wo + bo + x[n]
        mu = hsd.mean(axis=-1, keepdims=True)
        var = ((hsd - mu) ** 2).mean(axis=-1, keepdims=True)
        out[n] = (hsd - mu) / np.sqrt(var + eps) * g + b
    return out


if __name__ == "__main__":
    key = jax.random.PRNGKey(0)
    N, L, D, H = 2, 8, 32, 4                          # batch, seq, hidden, heads
    ks = jax.random.split(key, 12)

    x = jax.random.normal(ks[0], (N, L, D), jnp.float32)
    wq = 0.1 * jax.random.normal(ks[1], (D, D), jnp.float32)
    bq = 0.1 * jax.random.normal(ks[2], (D,), jnp.float32)
    wk = 0.1 * jax.random.normal(ks[3], (D, D), jnp.float32)
    bk = 0.1 * jax.random.normal(ks[4], (D,), jnp.float32)
    wv = 0.1 * jax.random.normal(ks[5], (D, D), jnp.float32)
    bv = 0.1 * jax.random.normal(ks[6], (D,), jnp.float32)
    wo = 0.1 * jax.random.normal(ks[7], (D, D), jnp.float32)
    bo = 0.1 * jax.random.normal(ks[8], (D,), jnp.float32)
    gamma = 1.0 + 0.1 * jax.random.normal(ks[9], (D,), jnp.float32)
    beta = 0.1 * jax.random.normal(ks[10], (D,), jnp.float32)

    # key-padding mask: 1 = attend, 0 = masked
    mask = jnp.ones((N, L), jnp.float32)
    mask = mask.at[0, -2:].set(0.0).at[1, -1:].set(0.0)

    params = (wq, bq, wk, bk, wv, bv, wo, bo, gamma, beta)
    prepared = prepare_bert_attention_params(params, num_heads=H)   # one-time bf16 split

    out = bert_attention_pallas(x, mask, prepared, num_heads=H)
    out = jax.block_until_ready(out)

    ref = _reference(x, mask, params, H)
    # bf16 MXU operands -> looser tolerance than a pure-f32 kernel
    np.testing.assert_allclose(np.asarray(out, np.float64), ref, rtol=5e-2, atol=5e-2)
    print("KERNEL_OK")
</pallas_src>

<mosaic_0001>
module attributes {stable_mosaic.version = 11 : i64} {
  func.func @_bert_attention_kernel(%arg0: i32, %arg1: i32, %arg2: i32, %arg3: memref<1x8x32xf32, #tpu.memory_space<vmem>>, %arg4: memref<1x8x32xf32, #tpu.memory_space<vmem>>, %arg5: memref<1x1x8xf32, #tpu.memory_space<vmem>>, %arg6: memref<1x32x8xbf16, #tpu.memory_space<vmem>>, %arg7: memref<1x1x8xf32, #tpu.memory_space<vmem>>, %arg8: memref<1x32x8xbf16, #tpu.memory_space<vmem>>, %arg9: memref<1x1x8xf32, #tpu.memory_space<vmem>>, %arg10: memref<1x32x8xbf16, #tpu.memory_space<vmem>>, %arg11: memref<1x1x8xf32, #tpu.memory_space<vmem>>, %arg12: memref<1x8x32xbf16, #tpu.memory_space<vmem>>, %arg13: memref<1x32xf32, #tpu.memory_space<vmem>>, %arg14: memref<1x32xf32, #tpu.memory_space<vmem>>, %arg15: memref<1x32xf32, #tpu.memory_space<vmem>>, %arg16: memref<1x8x32xf32, #tpu.memory_space<vmem>>, %arg17: memref<8x32xf32, #tpu.memory_space<vmem>>) attributes {dimension_semantics = [#tpu.dimension_semantics<parallel>, #tpu.dimension_semantics<parallel>, #tpu.dimension_semantics<arbitrary>], iteration_bounds = array<i64: 2, 1, 4>, scalar_prefetch = 0 : i64, scratch_operands = 1 : i64, tpu.core_type = #tpu.core_type<tc>, window_params = [{transform_indices = @transform_0, window_bounds = array<i64: 1, 8, 32>}, {transform_indices = @transform_1, window_bounds = array<i64: 1, 8, 32>}, {transform_indices = @transform_2, window_bounds = array<i64: 1, 1, 8>}, {transform_indices = @transform_3, window_bounds = array<i64: 1, 32, 8>}, {transform_indices = @transform_4, window_bounds = array<i64: 1, 1, 8>}, {transform_indices = @transform_5, window_bounds = array<i64: 1, 32, 8>}, {transform_indices = @transform_6, window_bounds = array<i64: 1, 1, 8>}, {transform_indices = @transform_7, window_bounds = array<i64: 1, 32, 8>}, {transform_indices = @transform_8, window_bounds = array<i64: 1, 1, 8>}, {transform_indices = @transform_9, window_bounds = array<i64: 1, 8, 32>}, {pipeline_mode = #tpu.pipeline_mode<synchronous>, transform_indices = @transform_10, window_bounds = array<i64: 1, 32>}, {pipeline_mode = #tpu.pipeline_mode<synchronous>, transform_indices = @transform_11, window_bounds = array<i64: 1, 32>}, {pipeline_mode = #tpu.pipeline_mode<synchronous>, transform_indices = @transform_12, window_bounds = array<i64: 1, 32>}, {transform_indices = @transform_13, window_bounds = array<i64: 1, 8, 32>}]} {
    %c0_i32 = arith.constant 0 : i32
    %0 = arith.cmpi eq, %arg2, %c0_i32 : i32
    %1 = arith.extui %0 : i1 to i32
    %c0_i32_0 = arith.constant 0 : i32
    %2 = arith.cmpi ne, %1, %c0_i32_0 : i32
    scf.if %2 {
      %cst_45 = arith.constant 0.000000e+00 : f32
      %66 = vector.broadcast %cst_45 : f32 to vector<8x32xf32>
      %c0_46 = arith.constant 0 : index
      %c0_47 = arith.constant 0 : index
      %67 = vector.load %arg17[%c0_46, %c0_47] : memref<8x32xf32, #tpu.memory_space<vmem>>, vector<8x32xf32>
      tpu.vector_store %arg17[%c0_46, %c0_47], %66 {strides = array<i32>} : memref<8x32xf32, #tpu.memory_space<vmem>>, vector<8x32xf32>,
    } else {
    }
    %c0 = arith.constant 0 : index
    %c0_1 = arith.constant 0 : index
    %c0_2 = arith.constant 0 : index
    %3 = vector.load %arg3[%c0, %c0_1, %c0_2] : memref<1x8x32xf32, #tpu.memory_space<vmem>>, vector<1x8x32xf32>
    %4 = vector.shape_cast %3 : vector<1x8x32xf32> to vector<8x32xf32>
    %5 = arith.truncf %4 : vector<8x32xf32> to vector<8x32xbf16>
    %c0_3 = arith.constant 0 : index
    %c0_4 = arith.constant 0 : index
    %c0_5 = arith.constant 0 : index
    %6 = vector.load %arg4[%c0_3, %c0_4, %c0_5] : memref<1x8x32xf32, #tpu.memory_space<vmem>>, vector<1x8x32xf32>
    %7 = vector.shape_cast %6 : vector<1x8x32xf32> to vector<8x32xf32>
    %8 = arith.truncf %7 : vector<8x32xf32> to vector<8x32xbf16>
    %c0_6 = arith.constant 0 : index
    %c0_7 = arith.constant 0 : index
    %c0_8 = arith.constant 0 : index
    %9 = vector.load %arg6[%c0_6, %c0_7, %c0_8] : memref<1x32x8xbf16, #tpu.memory_space<vmem>>, vector<1x32x8xbf16>
    %10 = vector.shape_cast %9 : vector<1x32x8xbf16> to vector<32x8xbf16>
    %cst = arith.constant dense<0.000000e+00> : vector<8x8xf32>
    %11 = tpu.matmul %5, %10, %cst {dimension_numbers = #tpu.dot_dimension_numbers<[1], [0], [0], [1], [0, 0, 1, 1], [], []>} : vector<8x32xbf16>, vector<32x8xbf16>, vector<8x8xf32> -> vector<8x8xf32>
    %c0_9 = arith.constant 0 : index
    %c0_10 = arith.constant 0 : index
    %c0_11 = arith.constant 0 : index
    %12 = vector.load %arg7[%c0_9, %c0_10, %c0_11] : memref<1x1x8xf32, #tpu.memory_space<vmem>>, vector<1x1x8xf32>
    %13 = vector.shape_cast %12 : vector<1x1x8xf32> to vector<1x8xf32>
    %14 = vector.broadcast %13 : vector<1x8xf32> to vector<8x8xf32>
    %15 = arith.addf %11, %14 : vector<8x8xf32>
    %cst_12 = arith.constant 0.353553385 : f32
    %16 = vector.broadcast %cst_12 : f32 to vector<8x8xf32>
    %17 = arith.mulf %15, %16 : vector<8x8xf32>
    %c0_13 = arith.constant 0 : index
    %c0_14 = arith.constant 0 : index
    %c0_15 = arith.constant 0 : index
    %18 = vector.load %arg8[%c0_13, %c0_14, %c0_15] : memref<1x32x8xbf16, #tpu.memory_space<vmem>>, vector<1x32x8xbf16>
    %19 = vector.shape_cast %18 : vector<1x32x8xbf16> to vector<32x8xbf16>
    %cst_16 = arith.constant dense<0.000000e+00> : vector<8x8xf32>
    %20 = tpu.matmul %8, %19, %cst_16 {dimension_numbers = #tpu.dot_dimension_numbers<[1], [0], [0], [1], [0, 0, 1, 1], [], []>} : vector<8x32xbf16>, vector<32x8xbf16>, vector<8x8xf32> -> vector<8x8xf32>
    %c0_17 = arith.constant 0 : index
    %c0_18 = arith.constant 0 : index
    %c0_19 = arith.constant 0 : index
    %21 = vector.load %arg9[%c0_17, %c0_18, %c0_19] : memref<1x1x8xf32, #tpu.memory_space<vmem>>, vector<1x1x8xf32>
    %22 = vector.shape_cast %21 : vector<1x1x8xf32> to vector<1x8xf32>
    %23 = vector.broadcast %22 : vector<1x8xf32> to vector<8x8xf32>
    %24 = arith.addf %20, %23 : vector<8x8xf32>
    %c0_20 = arith.constant 0 : index
    %c0_21 = arith.constant 0 : index
    %c0_22 = arith.constant 0 : index
    %25 = vector.load %arg10[%c0_20, %c0_21, %c0_22] : memref<1x32x8xbf16, #tpu.memory_space<vmem>>, vector<1x32x8xbf16>
    %26 = vector.shape_cast %25 : vector<1x32x8xbf16> to vector<32x8xbf16>
    %cst_23 = arith.constant dense<0.000000e+00> : vector<8x8xf32>
    %27 = tpu.matmul %8, %26, %cst_23 {dimension_numbers = #tpu.dot_dimension_numbers<[1], [0], [0], [1], [0, 0, 1, 1], [], []>} : vector<8x32xbf16>, vector<32x8xbf16>, vector<8x8xf32> -> vector<8x8xf32>
    %c0_24 = arith.constant 0 : index
    %c0_25 = arith.constant 0 : index
    %c0_26 = arith.constant 0 : index
    %28 = vector.load %arg11[%c0_24, %c0_25, %c0_26] : memref<1x1x8xf32, #tpu.memory_space<vmem>>, vector<1x1x8xf32>
    %29 = vector.shape_cast %28 : vector<1x1x8xf32> to vector<1x8xf32>
    %30 = vector.broadcast %29 : vector<1x8xf32> to vector<8x8xf32>
    %31 = arith.addf %27, %30 : vector<8x8xf32>
    %c0_27 = arith.constant 0 : index
    %c0_28 = arith.constant 0 : index
    %c0_29 = arith.constant 0 : index
    %32 = vector.load %arg5[%c0_27, %c0_28, %c0_29] : memref<1x1x8xf32, #tpu.memory_space<vmem>>, vector<1x1x8xf32>
    %33 = vector.shape_cast %32 : vector<1x1x8xf32> to vector<1x8xf32>
    %cst_30 = arith.constant 1.000000e+00 : f32
    %34 = vector.broadcast %cst_30 : f32 to vector<1x8xf32>
    %35 = arith.subf %34, %33 : vector<1x8xf32>
    %cst_31 = arith.constant -1.000000e+04 : f32
    %36 = vector.broadcast %cst_31 : f32 to vector<1x8xf32>
    %37 = arith.mulf %35, %36 : vector<1x8xf32>
    %38 = arith.truncf %17 : vector<8x8xf32> to vector<8x8xbf16>
    %39 = arith.truncf %24 : vector<8x8xf32> to vector<8x8xbf16>
    %cst_32 = arith.constant dense<0.000000e+00> : vector<8x8xf32>
    %40 = tpu.matmul %38, %39, %cst_32 {dimension_numbers = #tpu.dot_dimension_numbers<[1], [1], [0], [0], [0, 0, 1, 0], [], []>} : vector<8x8xbf16>, vector<8x8xbf16>, vector<8x8xf32> -> vector<8x8xf32>
    %41 = vector.broadcast %37 : vector<1x8xf32> to vector<8x8xf32>
    %42 = arith.addf %40, %41 : vector<8x8xf32>
    %cst_33 = arith.constant dense<0xFF800000> : vector<8xf32>
    %43 = vector.multi_reduction <maximumf>, %42, %cst_33 [1] : vector<8x8xf32> to vector<8xf32>
    %44 = vector.shape_cast %43 : vector<8xf32> to vector<8x1xf32>
    %45 = vector.broadcast %44 : vector<8x1xf32> to vector<8x8xf32>
    %46 = arith.subf %42, %45 : vector<8x8xf32>
    %47 = math.exp %46 : vector<8x8xf32>
    %cst_34 = arith.constant dense<0.000000e+00> : vector<8xf32>
    %48 = vector.multi_reduction <add>, %47, %cst_34 [1] : vector<8x8xf32> to vector<8xf32>
    %49 = vector.shape_cast %48 : vector<8xf32> to vector<8x1xf32>
    %50 = tpu.reciprocal %49 {approx = true} : vector<8x1xf32> -> vector<8x1xf32>
    %51 = vector.broadcast %50 : vector<8x1xf32> to vector<8x8xf32>
    %52 = arith.mulf %47, %51 : vector<8x8xf32>
    %53 = arith.truncf %52 : vector<8x8xf32> to vector<8x8xbf16>
    %54 = arith.truncf %31 : vector<8x8xf32> to vector<8x8xbf16>
    %cst_35 = arith.constant dense<0.000000e+00> : vector<8x8xf32>
    %55 = tpu.matmul %53, %54, %cst_35 {dimension_numbers = #tpu.dot_dimension_numbers<[1], [0], [0], [1], [0, 0, 1, 1], [], []>} : vector<8x8xbf16>, vector<8x8xbf16>, vector<8x8xf32> -> vector<8x8xf32>
    %c0_36 = arith.constant 0 : index
    %c0_37 = arith.constant 0 : index
    %56 = vector.load %arg17[%c0_36, %c0_37] : memref<8x32xf32, #tpu.memory_space<vmem>>, vector<8x32xf32>
    %57 = arith.truncf %55 : vector<8x8xf32> to vector<8x8xbf16>
    %c0_38 = arith.constant 0 : index
    %c0_39 = arith.constant 0 : index
    %c0_40 = arith.constant 0 : index
    %58 = vector.load %arg12[%c0_38, %c0_39, %c0_40] : memref<1x8x32xbf16, #tpu.memory_space<vmem>>, vector<1x8x32xbf16>
    %59 = vector.shape_cast %58 : vector<1x8x32xbf16> to vector<8x32xbf16>
    %cst_41 = arith.constant dense<0.000000e+00> : vector<8x32xf32>
    %60 = tpu.matmul %57, %59, %cst_41 {dimension_numbers = #tpu.dot_dimension_numbers<[1], [0], [0], [1], [0, 0, 1, 1], [], []>} : vector<8x8xbf16>, vector<8x32xbf16>, vector<8x32xf32> -> vector<8x32xf32>
    %61 = arith.addf %56, %60 : vector<8x32xf32>
    %c0_42 = arith.constant 0 : index
    %c0_43 = arith.constant 0 : index
    %62 = vector.load %arg17[%c0_42, %c0_43] : memref<8x32xf32, #tpu.memory_space<vmem>>, vector<8x32xf32>
    tpu.vector_store %arg17[%c0_42, %c0_43], %61 {strides = array<i32>} : memref<8x32xf32, #tpu.memory_space<vmem>>, vector<8x32xf32>,
    %c3_i32 = arith.constant 3 : i32
    %63 = arith.cmpi eq, %arg2, %c3_i32 : i32
    %64 = arith.extui %63 : i1 to i32
    %c0_i32_44 = arith.constant 0 : i32
    %65 = arith.cmpi ne, %64, %c0_i32_44 : i32
    scf.if %65 {
      %c0_45 = arith.constant 0 : index
      %c0_46 = arith.constant 0 : index
      %66 = vector.load %arg17[%c0_45, %c0_46] : memref<8x32xf32, #tpu.memory_space<vmem>>, vector<8x32xf32>
      %c0_47 = arith.constant 0 : index
      %c0_48 = arith.constant 0 : index
      %67 = vector.load %arg13[%c0_47, %c0_48] : memref<1x32xf32, #tpu.memory_space<vmem>>, vector<1x32xf32>
      %68 = vector.broadcast %67 : vector<1x32xf32> to vector<8x32xf32>
      %69 = arith.addf %66, %68 : vector<8x32xf32>
      %70 = arith.addf %69, %4 : vector<8x32xf32>
      %cst_49 = arith.constant dense<0.000000e+00> : vector<8xf32>
      %71 = vector.multi_reduction <add>, %70, %cst_49 [1] : vector<8x32xf32> to vector<8xf32>
      %72 = vector.shape_cast %71 : vector<8xf32> to vector<8x1xf32>
      %cst_50 = arith.constant 3.200000e+01 : f32
      %73 = vector.broadcast %cst_50 : f32 to vector<8x1xf32>
      %74 = arith.divf %72, %73 : vector<8x1xf32>
      %75 = vector.broadcast %74 : vector<8x1xf32> to vector<8x32xf32>
      %76 = arith.subf %70, %75 : vector<8x32xf32>
      %77 = arith.mulf %76, %76 : vector<8x32xf32>
      %cst_51 = arith.constant dense<0.000000e+00> : vector<8xf32>
      %78 = vector.multi_reduction <add>, %77, %cst_51 [1] : vector<8x32xf32> to vector<8xf32>
      %79 = vector.shape_cast %78 : vector<8xf32> to vector<8x1xf32>
      %cst_52 = arith.constant 3.200000e+01 : f32
      %80 = vector.broadcast %cst_52 : f32 to vector<8x1xf32>
      %81 = arith.divf %79, %80 : vector<8x1xf32>
      %82 = vector.broadcast %74 : vector<8x1xf32> to vector<8x32xf32>
      %83 = arith.subf %70, %82 : vector<8x32xf32>
      %cst_53 = arith.constant 9.99999974E-6 : f32
      %84 = vector.broadcast %cst_53 : f32 to vector<8x1xf32>
      %85 = arith.addf %81, %84 : vector<8x1xf32>
      %86 = math.rsqrt %85 : vector<8x1xf32>
      %87 = vector.broadcast %86 : vector<8x1xf32> to vector<8x32xf32>
      %88 = arith.mulf %83, %87 : vector<8x32xf32>
      %c0_54 = arith.constant 0 : index
      %c0_55 = arith.constant 0 : index
      %89 = vector.load %arg14[%c0_54, %c0_55] : memref<1x32xf32, #tpu.memory_space<vmem>>, vector<1x32xf32>
      %90 = vector.broadcast %89 : vector<1x32xf32> to vector<8x32xf32>
      %91 = arith.mulf %88, %90 : vector<8x32xf32>
      %c0_56 = arith.constant 0 : index
      %c0_57 = arith.constant 0 : index
      %92 = vector.load %arg15[%c0_56, %c0_57] : memref<1x32xf32, #tpu.memory_space<vmem>>, vector<1x32xf32>
      %93 = vector.broadcast %92 : vector<1x32xf32> to vector<8x32xf32>
      %94 = arith.addf %91, %93 : vector<8x32xf32>
      %c0_58 = arith.constant 0 : index
      %c0_59 = arith.constant 0 : index
      %c0_60 = arith.constant 0 : index
      %95 = vector.load %arg16[%c0_58, %c0_59, %c0_60] : memref<1x8x32xf32, #tpu.memory_space<vmem>>, vector<1x8x32xf32>
      %96 = vector.shape_cast %95 : vector<1x8x32xf32> to vector<8x32xf32>
      %97 = vector.shape_cast %94 : vector<8x32xf32> to vector<1x8x32xf32>
      tpu.vector_store %arg16[%c0_58, %c0_59, %c0_60], %97 {strides = array<i32>} : memref<1x8x32xf32, #tpu.memory_space<vmem>>, vector<1x8x32xf32>,
    } else {
    }
    return
  }
  func.func @transform_0(%arg0: i32, %arg1: i32, %arg2: i32) -> (i32, i32, i32) {
    %c0_i32 = arith.constant 0 : i32
    %c0_i32_0 = arith.constant 0 : i32
    return %arg0, %arg1, %c0_i32 : i32, i32, i32
  }
  func.func @transform_1(%arg0: i32, %arg1: i32, %arg2: i32) -> (i32, i32, i32) {
    %c0_i32 = arith.constant 0 : i32
    %c0_i32_0 = arith.constant 0 : i32
    %c0_i32_1 = arith.constant 0 : i32
    return %arg0, %c0_i32, %c0_i32_0 : i32, i32, i32
  }
  func.func @transform_2(%arg0: i32, %arg1: i32, %arg2: i32) -> (i32, i32, i32) {
    %c0_i32 = arith.constant 0 : i32
    %c0_i32_0 = arith.constant 0 : i32
    %c0_i32_1 = arith.constant 0 : i32
    return %arg0, %c0_i32, %c0_i32_0 : i32, i32, i32
  }
  func.func @transform_3(%arg0: i32, %arg1: i32, %arg2: i32) -> (i32, i32, i32) {
    %c0_i32 = arith.constant 0 : i32
    %c0_i32_0 = arith.constant 0 : i32
    %c0_i32_1 = arith.constant 0 : i32
    return %arg2, %c0_i32, %c0_i32_0 : i32, i32, i32
  }
  func.func @transform_4(%arg0: i32, %arg1: i32, %arg2: i32) -> (i32, i32, i32) {
    %c0_i32 = arith.constant 0 : i32
    %c0_i32_0 = arith.constant 0 : i32
    %c0_i32_1 = arith.constant 0 : i32
    return %arg2, %c0_i32, %c0_i32_0 : i32, i32, i32
  }
  func.func @transform_5(%arg0: i32, %arg1: i32, %arg2: i32) -> (i32, i32, i32) {
    %c0_i32 = arith.constant 0 : i32
    %c0_i32_0 = arith.constant 0 : i32
    %c0_i32_1 = arith.constant 0 : i32
    return %arg2, %c0_i32, %c0_i32_0 : i32, i32, i32
  }
  func.func @transform_6(%arg0: i32, %arg1: i32, %arg2: i32) -> (i32, i32, i32) {
    %c0_i32 = arith.constant 0 : i32
    %c0_i32_0 = arith.constant 0 : i32
    %c0_i32_1 = arith.constant 0 : i32
    return %arg2, %c0_i32, %c0_i32_0 : i32, i32, i32
  }
  func.func @transform_7(%arg0: i32, %arg1: i32, %arg2: i32) -> (i32, i32, i32) {
    %c0_i32 = arith.constant 0 : i32
    %c0_i32_0 = arith.constant 0 : i32
    %c0_i32_1 = arith.constant 0 : i32
    return %arg2, %c0_i32, %c0_i32_0 : i32, i32, i32
  }
  func.func @transform_8(%arg0: i32, %arg1: i32, %arg2: i32) -> (i32, i32, i32) {
    %c0_i32 = arith.constant 0 : i32
    %c0_i32_0 = arith.constant 0 : i32
    %c0_i32_1 = arith.constant 0 : i32
    return %arg2, %c0_i32, %c0_i32_0 : i32, i32, i32
  }
  func.func @transform_9(%arg0: i32, %arg1: i32, %arg2: i32) -> (i32, i32, i32) {
    %c0_i32 = arith.constant 0 : i32
    %c0_i32_0 = arith.constant 0 : i32
    %c0_i32_1 = arith.constant 0 : i32
    return %arg2, %c0_i32, %c0_i32_0 : i32, i32, i32
  }
  func.func @transform_10(%arg0: i32, %arg1: i32, %arg2: i32) -> (i32, i32) {
    %c0_i32 = arith.constant 0 : i32
    %c0_i32_0 = arith.constant 0 : i32
    %c0_i32_1 = arith.constant 0 : i32
    return %c0_i32, %c0_i32_0 : i32, i32
  }
  func.func @transform_11(%arg0: i32, %arg1: i32, %arg2: i32) -> (i32, i32) {
    %c0_i32 = arith.constant 0 : i32
    %c0_i32_0 = arith.constant 0 : i32
    %c0_i32_1 = arith.constant 0 : i32
    return %c0_i32, %c0_i32_0 : i32, i32
  }
  func.func @transform_12(%arg0: i32, %arg1: i32, %arg2: i32) -> (i32, i32) {
    %c0_i32 = arith.constant 0 : i32
    %c0_i32_0 = arith.constant 0 : i32
    %c0_i32_1 = arith.constant 0 : i32
    return %c0_i32, %c0_i32_0 : i32, i32
  }
  func.func @transform_13(%arg0: i32, %arg1: i32, %arg2: i32) -> (i32, i32, i32) {
    %c0_i32 = arith.constant 0 : i32
    %c0_i32_0 = arith.constant 0 : i32
    return %arg0, %arg1, %c0_i32 : i32, i32, i32
  }
}

</mosaic_0001>

<llo_original>
// kernel: tpu_custom_call.1
$region0: #{tpu_custom_call.1}
  #allocation0 [shape = 'u32[]', space=smem, size = 0x4, offset = 0x4, fixed_abs, tag = 'smem constant byte address 0x4 - core index']
  #allocation1 [shape = 'u32[144,128]{1,0:T(1,128)}', space=vmem, size = 0x12000, scoped, tag = 'internal scratch']
  #allocation2 [shape = 'f32[8,32]{1,0:T(8,128)}', space=vmem, size = 0x1000, scoped, tag = 'scratch operand']
  %s0 = inlined_call_operand.vmem [shape: f32[2,8,32], index: 0, kind: input, shape index: {}]
  %s1 = inlined_call_operand.vmem [shape: f32[2,8,32], index: 1, kind: input, shape index: {}]
  %s2 = inlined_call_operand.vmem [shape: f32[2,1,8], index: 2, kind: input, shape index: {}]
  %s3 = inlined_call_operand.vmem [shape: bf16[4,32,8], index: 3, kind: input, shape index: {}]
  %s4 = inlined_call_operand.vmem [shape: f32[4,1,8], index: 4, kind: input, shape index: {}]
  %s5 = inlined_call_operand.vmem [shape: bf16[4,32,8], index: 5, kind: input, shape index: {}]
  %s6 = inlined_call_operand.vmem [shape: f32[4,1,8], index: 6, kind: input, shape index: {}]
  %s7 = inlined_call_operand.vmem [shape: bf16[4,32,8], index: 7, kind: input, shape index: {}]
  %s8 = inlined_call_operand.vmem [shape: f32[4,1,8], index: 8, kind: input, shape index: {}]
  %s9 = inlined_call_operand.vmem [shape: bf16[4,8,32], index: 9, kind: input, shape index: {}]
  %s10 = inlined_call_operand.vmem [shape: f32[1,32], index: 10, kind: input, shape index: {}]
  %s11 = inlined_call_operand.vmem [shape: f32[1,32], index: 11, kind: input, shape index: {}]
  %s12 = inlined_call_operand.vmem [shape: f32[1,32], index: 12, kind: input, shape index: {}]
  %s13 = inlined_call_operand.hbm [shape: f32[2,8,32], index: 13, kind: output, shape index: {}]
  %s14 = sld [smem:[#allocation0]]
  $region93: #{tpu_custom_call.1} parent=0
    _
  %s16 = ssub.s32 1, %s14
  %s17 = scalar_select 0, %s16, %s14
  $region1: #{tpu_custom_call.1} parent=0
    #allocation3 [shape = 'u8[8192]{0}', space=vmem, size = 0x2000, scoped, tag = 'output window, operand 0']
    #allocation4 [shape = 's32[2]{0}', space=sflag, size = 0x8, scoped, tag = 'scoped memory for tpu_custom_call.1']
    %18 = vsyncpa [#allocation4], 0
    %s19 = scalar_lea.sflag [#allocation4], 1
    %20 = vsyncpa %s19, 0
    loop: start=0, step=1, limit=10
    $region2: #{tpu_custom_call.1} parent=1 // loop_pre_header
      _
    $region3: #{tpu_custom_call.1} parent=1 // loop_header
      %s22 = sphi 0, %s26
      %p23 = scmp.ge.s32.totalorder %s22, 10
      %s29 = sphi 0, %s48
      %s30 = sphi 0, %s44
      %s31 = sphi 0, %s40
      %s32 = sphi 0, %s29
      %s33 = sphi 0, %s30
      %s34 = sphi 0, %s31
      %s35 = sphi 0, %s32
      %s36 = sphi 0, %s33
      %s37 = sphi 0, %s34
      %s53 = sphi 0, %s55
      %s56 = sphi 0, %s53
      %s57 = sphi 0, %s56
      %s73 = sphi 0, %s57
      %s79 = sphi 0, %s81
      %s82 = sphi 0, %s79
      %s83 = sphi 0, %s82
      %s99 = sphi 0, %s83
      %s105 = sphi 0, %s107
      %s108 = sphi 0, %s105
      %s109 = sphi 0, %s108
      %s125 = sphi 0, %s109
      %s131 = sphi 0, %s133
      %s134 = sphi 0, %s131
      %s135 = sphi 0, %s134
      %s151 = sphi 0, %s135
      %s157 = sphi 0, %s159
      %s160 = sphi 0, %s157
      %s161 = sphi 0, %s160
      %s177 = sphi 0, %s161
      %s183 = sphi 0, %s185
      %s186 = sphi 0, %s183
      %s187 = sphi 0, %s186
      %s203 = sphi 0, %s187
      %s209 = sphi 0, %s211
      %s212 = sphi 0, %s209
      %s213 = sphi 0, %s212
      %s229 = sphi 0, %s213
      %s235 = sphi 0, %s237
      %s238 = sphi 0, %s235
      %s239 = sphi 0, %s238
      %s255 = sphi 0, %s239
      %s261 = sphi 0, %s263
      %s264 = sphi 0, %s261
      %s265 = sphi 0, %s264
      %s281 = sphi 0, %s265
      %s287 = sphi 0, %s289
      %s290 = sphi 0, %s287
      %s291 = sphi 0, %s290
      %s307 = sphi 0, %s291
      %s311 = sphi 0, %s311
      %s313 = sphi 0, %s311
      %s314 = sphi 0, %s313
      %s328 = sphi 0, %s314
      %s332 = sphi 0, %s332
      %s334 = sphi 0, %s332
      %s335 = sphi 0, %s334
      %s349 = sphi 0, %s335
      %s353 = sphi 0, %s353
      %s355 = sphi 0, %s353
      %s356 = sphi 0, %s355
      %s370 = sphi 0, %s356
      %s378 = sphi 0, %s380
      %s381 = sphi 0, %s378
      %s382 = sphi 0, %s381
      %s398 = sphi 0, %s382
    $region4: #{tpu_custom_call.1} parent=1 // loop_header_branch
      %25 = sbr.rel (%p23) target = $region8
    $region5: #{tpu_custom_call.1} parent=1 // loop_body
      %s27 = ssub.s32 %s22, 1
      %s28 = ssub.s32 %s22, 2
      %s38 = sadd.s32 1, %s31
      %p39 = scmp.ge.s32.totalorder %s38, 4
      %s40 = scalar_select %p39, 0, %s38
      %s41 = sadd.s32 1, %s30
      %s42 = scalar_select %p39, %s41, %s30
      %p43 = scmp.ge.s32.totalorder %s42, 1
      %s44 = scalar_select %p43, 0, %s42
      %s45 = sadd.s32 1, %s29
      %s46 = scalar_select %p43, %s45, %s29
      %p47 = scmp.ge.s32.totalorder %s46, 2
      %s48 = scalar_select %p47, 0, %s46
      %s49 = ssub.s32 %s29, %s48
      %s50 = ssub.s32 %s30, %s44
      %s51 = sor.u32 %s49, %s50
      %p52 = scmp.eq.s32.totalorder %s51, 0
      %s54 = sadd.s32 %s53, 1
      %s55 = scalar_select %p52, %s53, %s54
      %p58 = pneg %p52
      %p59 = scmp.eq.s32.totalorder %s22, 7
      %p60 = por %p58, %p59
      %p61 = scmp.ne.s32.totalorder %s53, %s56
      %p62 = scmp.eq.s32.totalorder %s22, 0
      %p63 = por %p61, %p62
      %p64 = scmp.ne.s32.totalorder %s53, %s56
      %p65 = scmp.eq.s32.totalorder %s27, 7
      %p66 = por %p64, %p65
      %p67 = scmp.ne.s32.totalorder %s56, %s57
      %p68 = scmp.eq.s32.totalorder %s27, 0
      %p69 = por %p67, %p68
      %p70 = scmp.ne.s32.totalorder %s56, %s57
      %p71 = scmp.eq.s32.totalorder %s28, 7
      %p72 = por %p70, %p71
      %p74 = scmp.ne.s32.totalorder %s57, %s73
      %p75 = scmp.eq.s32.totalorder %s28, 0
      %p76 = por %p74, %p75
      %s77 = ssub.s32 %s29, %s48
      %p78 = scmp.eq.s32.totalorder %s77, 0
      %s80 = sadd.s32 %s79, 1
      %s81 = scalar_select %p78, %s79, %s80
      %p84 = pneg %p78
      %p85 = scmp.eq.s32.totalorder %s22, 7
      %p86 = por %p84, %p85
      %p87 = scmp.ne.s32.totalorder %s79, %s82
      %p88 = scmp.eq.s32.totalorder %s22, 0
      %p89 = por %p87, %p88
      %p90 = scmp.ne.s32.totalorder %s79, %s82
      %p91 = scmp.eq.s32.totalorder %s27, 7
      %p92 = por %p90, %p91
      %p93 = scmp.ne.s32.totalorder %s82, %s83
      %p94 = scmp.eq.s32.totalorder %s27, 0
      %p95 = por %p93, %p94
      %p96 = scmp.ne.s32.totalorder %s82, %s83
      %p97 = scmp.eq.s32.totalorder %s28, 7
      %p98 = por %p96, %p97
      %p100 = scmp.ne.s32.totalorder %s83, %s99
      %p101 = scmp.eq.s32.totalorder %s28, 0
      %p102 = por %p100, %p101
      %s103 = ssub.s32 %s29, %s48
      %p104 = scmp.eq.s32.totalorder %s103, 0
      %s106 = sadd.s32 %s105, 1
      %s107 = scalar_select %p104, %s105, %s106
      %p110 = pneg %p104
      %p111 = scmp.eq.s32.totalorder %s22, 7
      %p112 = por %p110, %p111
      %p113 = scmp.ne.s32.totalorder %s105, %s108
      %p114 = scmp.eq.s32.totalorder %s22, 0
      %p115 = por %p113, %p114
      %p116 = scmp.ne.s32.totalorder %s105, %s108
      %p117 = scmp.eq.s32.totalorder %s27, 7
      %p118 = por %p116, %p117
      %p119 = scmp.ne.s32.totalorder %s108, %s109
      %p120 = scmp.eq.s32.totalorder %s27, 0
      %p121 = por %p119, %p120
      %p122 = scmp.ne.s32.totalorder %s108, %s109
      %p123 = scmp.eq.s32.totalorder %s28, 7
      %p124 = por %p122, %p123
      %p126 = scmp.ne.s32.totalorder %s109, %s125
      %p127 = scmp.eq.s32.totalorder %s28, 0
      %p128 = por %p126, %p127
      %s129 = ssub.s32 %s31, %s40
      %p130 = scmp.eq.s32.totalorder %s129, 0
      %s132 = sadd.s32 %s131, 1
      %s133 = scalar_select %p130, %s131, %s132
      %p136 = pneg %p130
      %p137 = scmp.eq.s32.totalorder %s22, 7
      %p138 = por %p136, %p137
      %p139 = scmp.ne.s32.totalorder %s131, %s134
      %p140 = scmp.eq.s32.totalorder %s22, 0
      %p141 = por %p139, %p140
      %p142 = scmp.ne.s32.totalorder %s131, %s134
      %p143 = scmp.eq.s32.totalorder %s27, 7
      %p144 = por %p142, %p143
      %p145 = scmp.ne.s32.totalorder %s134, %s135
      %p146 = scmp.eq.s32.totalorder %s27, 0
      %p147 = por %p145, %p146
      %p148 = scmp.ne.s32.totalorder %s134, %s135
      %p149 = scmp.eq.s32.totalorder %s28, 7
      %p150 = por %p148, %p149
      %p152 = scmp.ne.s32.totalorder %s135, %s151
      %p153 = scmp.eq.s32.totalorder %s28, 0
      %p154 = por %p152, %p153
      %s155 = ssub.s32 %s31, %s40
      %p156 = scmp.eq.s32.totalorder %s155, 0
      %s158 = sadd.s32 %s157, 1
      %s159 = scalar_select %p156, %s157, %s158
      %p162 = pneg %p156
      %p163 = scmp.eq.s32.totalorder %s22, 7
      %p164 = por %p162, %p163
      %p165 = scmp.ne.s32.totalorder %s157, %s160
      %p166 = scmp.eq.s32.totalorder %s22, 0
      %p167 = por %p165, %p166
      %p168 = scmp.ne.s32.totalorder %s157, %s160
      %p169 = scmp.eq.s32.totalorder %s27, 7
      %p170 = por %p168, %p169
      %p171 = scmp.ne.s32.totalorder %s160, %s161
      %p172 = scmp.eq.s32.totalorder %s27, 0
      %p173 = por %p171, %p172
      %p174 = scmp.ne.s32.totalorder %s160, %s161
      %p175 = scmp.eq.s32.totalorder %s28, 7
      %p176 = por %p174, %p175
      %p178 = scmp.ne.s32.totalorder %s161, %s177
      %p179 = scmp.eq.s32.totalorder %s28, 0
      %p180 = por %p178, %p179
      %s181 = ssub.s32 %s31, %s40
      %p182 = scmp.eq.s32.totalorder %s181, 0
      %s184 = sadd.s32 %s183, 1
      %s185 = scalar_select %p182, %s183, %s184
      %p188 = pneg %p182
      %p189 = scmp.eq.s32.totalorder %s22, 7
      %p190 = por %p188, %p189
      %p191 = scmp.ne.s32.totalorder %s183, %s186
      %p192 = scmp.eq.s32.totalorder %s22, 0
      %p193 = por %p191, %p192
      %p194 = scmp.ne.s32.totalorder %s183, %s186
      %p195 = scmp.eq.s32.totalorder %s27, 7
      %p196 = por %p194, %p195
      %p197 = scmp.ne.s32.totalorder %s186, %s187
      %p198 = scmp.eq.s32.totalorder %s27, 0
      %p199 = por %p197, %p198
      %p200 = scmp.ne.s32.totalorder %s186, %s187
      %p201 = scmp.eq.s32.totalorder %s28, 7
      %p202 = por %p200, %p201
      %p204 = scmp.ne.s32.totalorder %s187, %s203
      %p205 = scmp.eq.s32.totalorder %s28, 0
      %p206 = por %p204, %p205
      %s207 = ssub.s32 %s31, %s40
      %p208 = scmp.eq.s32.totalorder %s207, 0
      %s210 = sadd.s32 %s209, 1
      %s211 = scalar_select %p208, %s209, %s210
      %p214 = pneg %p208
      %p215 = scmp.eq.s32.totalorder %s22, 7
      %p216 = por %p214, %p215
      %p217 = scmp.ne.s32.totalorder %s209, %s212
      %p218 = scmp.eq.s32.totalorder %s22, 0
      %p219 = por %p217, %p218
      %p220 = scmp.ne.s32.totalorder %s209, %s212
      %p221 = scmp.eq.s32.totalorder %s27, 7
      %p222 = por %p220, %p221
      %p223 = scmp.ne.s32.totalorder %s212, %s213
      %p224 = scmp.eq.s32.totalorder %s27, 0
      %p225 = por %p223, %p224
      %p226 = scmp.ne.s32.totalorder %s212, %s213
      %p227 = scmp.eq.s32.totalorder %s28, 7
      %p228 = por %p226, %p227
      %p230 = scmp.ne.s32.totalorder %s213, %s229
      %p231 = scmp.eq.s32.totalorder %s28, 0
      %p232 = por %p230, %p231
      %s233 = ssub.s32 %s31, %s40
      %p234 = scmp.eq.s32.totalorder %s233, 0
      %s236 = sadd.s32 %s235, 1
      %s237 = scalar_select %p234, %s235, %s236
      %p240 = pneg %p234
      %p241 = scmp.eq.s32.totalorder %s22, 7
      %p242 = por %p240, %p241
      %p243 = scmp.ne.s32.totalorder %s235, %s238
      %p244 = scmp.eq.s32.totalorder %s22, 0
      %p245 = por %p243, %p244
      %p246 = scmp.ne.s32.totalorder %s235, %s238
      %p247 = scmp.eq.s32.totalorder %s27, 7
      %p248 = por %p246, %p247
      %p249 = scmp.ne.s32.totalorder %s238, %s239
      %p250 = scmp.eq.s32.totalorder %s27, 0
      %p251 = por %p249, %p250
      %p252 = scmp.ne.s32.totalorder %s238, %s239
      %p253 = scmp.eq.s32.totalorder %s28, 7
      %p254 = por %p252, %p253
      %p256 = scmp.ne.s32.totalorder %s239, %s255
      %p257 = scmp.eq.s32.totalorder %s28, 0
      %p258 = por %p256, %p257
      %s259 = ssub.s32 %s31, %s40
      %p260 = scmp.eq.s32.totalorder %s259, 0
      %s262 = sadd.s32 %s261, 1
      %s263 = scalar_select %p260, %s261, %s262
      %p266 = pneg %p260
      %p267 = scmp.eq.s32.totalorder %s22, 7
      %p268 = por %p266, %p267
      %p269 = scmp.ne.s32.totalorder %s261, %s264
      %p270 = scmp.eq.s32.totalorder %s22, 0
      %p271 = por %p269, %p270
      %p272 = scmp.ne.s32.totalorder %s261, %s264
      %p273 = scmp.eq.s32.totalorder %s27, 7
      %p274 = por %p272, %p273
      %p275 = scmp.ne.s32.totalorder %s264, %s265
      %p276 = scmp.eq.s32.totalorder %s27, 0
      %p277 = por %p275, %p276
      %p278 = scmp.ne.s32.totalorder %s264, %s265
      %p279 = scmp.eq.s32.totalorder %s28, 7
      %p280 = por %p278, %p279
      %p282 = scmp.ne.s32.totalorder %s265, %s281
      %p283 = scmp.eq.s32.totalorder %s28, 0
      %p284 = por %p282, %p283
      %s285 = ssub.s32 %s31, %s40
      %p286 = scmp.eq.s32.totalorder %s285, 0
      %s288 = sadd.s32 %s287, 1
      %s289 = scalar_select %p286, %s287, %s288
      %p292 = pneg %p286
      %p293 = scmp.eq.s32.totalorder %s22, 7
      %p294 = por %p292, %p293
      %p295 = scmp.ne.s32.totalorder %s287, %s290
      %p296 = scmp.eq.s32.totalorder %s22, 0
      %p297 = por %p295, %p296
      %p298 = scmp.ne.s32.totalorder %s287, %s290
      %p299 = scmp.eq.s32.totalorder %s27, 7
      %p300 = por %p298, %p299
      %p301 = scmp.ne.s32.totalorder %s290, %s291
      %p302 = scmp.eq.s32.totalorder %s27, 0
      %p303 = por %p301, %p302
      %p304 = scmp.ne.s32.totalorder %s290, %s291
      %p305 = scmp.eq.s32.totalorder %s28, 7
      %p306 = por %p304, %p305
      %p308 = scmp.ne.s32.totalorder %s291, %s307
      %p309 = scmp.eq.s32.totalorder %s28, 0
      %p310 = por %p308, %p309
      %s312 = sadd.s32 %s311, 1
      %p315 = scmp.eq.s32.totalorder %s22, 7
      %p316 = scmp.ne.s32.totalorder %s311, %s313
      %p317 = scmp.eq.s32.totalorder %s22, 0
      %p318 = por %p316, %p317
      %p319 = scmp.ne.s32.totalorder %s311, %s313
      %p320 = scmp.eq.s32.totalorder %s27, 7
      %p321 = por %p319, %p320
      %p322 = scmp.ne.s32.totalorder %s313, %s314
      %p323 = scmp.eq.s32.totalorder %s27, 0
      %p324 = por %p322, %p323
      %p325 = scmp.ne.s32.totalorder %s313, %s314
      %p326 = scmp.eq.s32.totalorder %s28, 7
      %p327 = por %p325, %p326
      %p329 = scmp.ne.s32.totalorder %s314, %s328
      %p330 = scmp.eq.s32.totalorder %s28, 0
      %p331 = por %p329, %p330
      %s333 = sadd.s32 %s332, 1
      %p336 = scmp.eq.s32.totalorder %s22, 7
      %p337 = scmp.ne.s32.totalorder %s332, %s334
      %p338 = scmp.eq.s32.totalorder %s22, 0
      %p339 = por %p337, %p338
      %p340 = scmp.ne.s32.totalorder %s332, %s334
      %p341 = scmp.eq.s32.totalorder %s27, 7
      %p342 = por %p340, %p341
      %p343 = scmp.ne.s32.totalorder %s334, %s335
      %p344 = scmp.eq.s32.totalorder %s27, 0
      %p345 = por %p343, %p344
      %p346 = scmp.ne.s32.totalorder %s334, %s335
      %p347 = scmp.eq.s32.totalorder %s28, 7
      %p348 = por %p346, %p347
      %p350 = scmp.ne.s32.totalorder %s335, %s349
      %p351 = scmp.eq.s32.totalorder %s28, 0
      %p352 = por %p350, %p351
      %s354 = sadd.s32 %s353, 1
      %p357 = scmp.eq.s32.totalorder %s22, 7
      %p358 = scmp.ne.s32.totalorder %s353, %s355
      %p359 = scmp.eq.s32.totalorder %s22, 0
      %p360 = por %p358, %p359
      %p361 = scmp.ne.s32.totalorder %s353, %s355
      %p362 = scmp.eq.s32.totalorder %s27, 7
      %p363 = por %p361, %p362
      %p364 = scmp.ne.s32.totalorder %s355, %s356
      %p365 = scmp.eq.s32.totalorder %s27, 0
      %p366 = por %p364, %p365
      %p367 = scmp.ne.s32.totalorder %s355, %s356
      %p368 = scmp.eq.s32.totalorder %s28, 7
      %p369 = por %p367, %p368
      %p371 = scmp.ne.s32.totalorder %s356, %s370
      %p372 = scmp.eq.s32.totalorder %s28, 0
      %p373 = por %p371, %p372
      %s374 = ssub.s32 %s29, %s48
      %s375 = ssub.s32 %s30, %s44
      %s376 = sor.u32 %s374, %s375
      %p377 = scmp.eq.s32.totalorder %s376, 0
      %s379 = sadd.s32 %s378, 1
      %s380 = scalar_select %p377, %s378, %s379
      %p383 = pneg %p377
      %p384 = scmp.eq.s32.totalorder %s22, 7
      %p385 = por %p383, %p384
      %p386 = scmp.ne.s32.totalorder %s378, %s381
      %p387 = scmp.eq.s32.totalorder %s22, 0
      %p388 = por %p386, %p387
      %p389 = scmp.ne.s32.totalorder %s378, %s381
      %p390 = scmp.eq.s32.totalorder %s27, 7
      %p391 = por %p389, %p390
      %p392 = scmp.ne.s32.totalorder %s381, %s382
      %p393 = scmp.eq.s32.totalorder %s27, 0
      %p394 = por %p392, %p393
      %p395 = scmp.ne.s32.totalorder %s381, %s382
      %p396 = scmp.eq.s32.totalorder %s28, 7
      %p397 = por %p395, %p396
      %p399 = scmp.ne.s32.totalorder %s382, %s398
      %p400 = scmp.eq.s32.totalorder %s28, 0
      %p401 = por %p399, %p400
      %p402 = scmp.le.s32.totalorder 1, %s22
      %p403 = scmp.lt.s32.totalorder %s22, 9
      %p404 = pnand %p402, %p403
      %p405 = pneg %p404
      // Predicated region
      $region9: #{tpu_custom_call.1} parent=5 // pred_check
        _
      $region10: #{tpu_custom_call.1} parent=5 // pred_check_branch
        %407 = sbr.rel (%p404) target = $region12
      $region11: #{tpu_custom_call.1} parent=5 // pred_region
        %s408 = ssub.s32 %s22, 1
        // Predicated region
        $region13: #{tpu_custom_call.1} parent=11 // pred_check
          %p409 = pneg %p324
        $region14: #{tpu_custom_call.1} parent=11 // pred_check_branch
          %411 = sbr.rel (%p409) target = $region16
        $region15: #{tpu_custom_call.1} parent=11 // pred_region
          _
        $region16: #{tpu_custom_call.1} parent=11 // pred_fallthru
          _
        // Predicated region
        $region17: #{tpu_custom_call.1} parent=11 // pred_check
          %p412 = pneg %p345
        $region18: #{tpu_custom_call.1} parent=11 // pred_check_branch
          %414 = sbr.rel (%p412) target = $region20
        $region19: #{tpu_custom_call.1} parent=11 // pred_region
          _
        $region20: #{tpu_custom_call.1} parent=11 // pred_fallthru
          _
        // Predicated region
        $region21: #{tpu_custom_call.1} parent=11 // pred_check
          %p415 = pneg %p366
        $region22: #{tpu_custom_call.1} parent=11 // pred_check_branch
          %417 = sbr.rel (%p415) target = $region24
        $region23: #{tpu_custom_call.1} parent=11 // pred_region
          _
        $region24: #{tpu_custom_call.1} parent=11 // pred_fallthru
          _
      $region12: #{tpu_custom_call.1} parent=5 // pred_fallthru
        _
      %p418 = scmp.lt.s32.totalorder %s22, 8
      // Predicated region
      $region25: #{tpu_custom_call.1} parent=5 // pred_check
        %p419 = pneg %p418
      $region26: #{tpu_custom_call.1} parent=5 // pred_check_branch
        %421 = sbr.rel (%p419) target = $region28
      $region27: #{tpu_custom_call.1} parent=5 // pred_region
        // Predicated region
        $region29: #{tpu_custom_call.1} parent=27 // pred_check
          %p422 = pneg %p63
        $region30: #{tpu_custom_call.1} parent=27 // pred_check_branch
          %424 = sbr.rel (%p422) target = $region32
        $region31: #{tpu_custom_call.1} parent=27 // pred_region
          %p425 = scmp.lt.s32.totalorder %s29, 1
          %s426 = scalar_select %p425, %s29, 1
          %p427 = scmp.lt.s32.totalorder %s30, 0
          %s428 = scalar_select %p427, %s30, 0
          %s429 = sadd.s32 %s428, %s426
          %s430 = smul.addr %s429, 8
          %s431 = scalar_lea.vmem %s0, %s430
        $region32: #{tpu_custom_call.1} parent=27 // pred_fallthru
          _
        // Predicated region
        $region33: #{tpu_custom_call.1} parent=27 // pred_check
          %p432 = pneg %p89
        $region34: #{tpu_custom_call.1} parent=27 // pred_check_branch
          %434 = sbr.rel (%p432) target = $region36
        $region35: #{tpu_custom_call.1} parent=27 // pred_region
          %p435 = scmp.lt.s32.totalorder %s29, 1
          %s436 = scalar_select %p435, %s29, 1
          %s437 = smul.addr %s436, 8
          %s438 = scalar_lea.vmem %s1, %s437
        $region36: #{tpu_custom_call.1} parent=27 // pred_fallthru
          _
        // Predicated region
        $region37: #{tpu_custom_call.1} parent=27 // pred_check
          %p439 = pneg %p115
        $region38: #{tpu_custom_call.1} parent=27 // pred_check_branch
          %441 = sbr.rel (%p439) target = $region40
        $region39: #{tpu_custom_call.1} parent=27 // pred_region
          %p442 = scmp.lt.s32.totalorder %s29, 1
          %s443 = scalar_select %p442, %s29, 1
          %s444 = scalar_lea.vmem %s2, %s443
        $region40: #{tpu_custom_call.1} parent=27 // pred_fallthru
          _
        // Predicated region
        $region41: #{tpu_custom_call.1} parent=27 // pred_check
          %p445 = pneg %p141
        $region42: #{tpu_custom_call.1} parent=27 // pred_check_branch
          %447 = sbr.rel (%p445) target = $region44
        $region43: #{tpu_custom_call.1} parent=27 // pred_region
          %p448 = scmp.lt.s32.totalorder %s31, 3
          %s449 = scalar_select %p448, %s31, 3
          %s450 = smul.addr %s449, 4
          %s451 = smul.addr %s450, 4
          %s452 = scalar_lea.vmem %s3, %s451
        $region44: #{tpu_custom_call.1} parent=27 // pred_fallthru
          _
        // Predicated region
        $region45: #{tpu_custom_call.1} parent=27 // pred_check
          %p453 = pneg %p167
        $region46: #{tpu_custom_call.1} parent=27 // pred_check_branch
          %455 = sbr.rel (%p453) target = $region48
        $region47: #{tpu_custom_call.1} parent=27 // pred_region
          %p456 = scmp.lt.s32.totalorder %s31, 3
          %s457 = scalar_select %p456, %s31, 3
          %s458 = scalar_lea.vmem %s4, %s457
        $region48: #{tpu_custom_call.1} parent=27 // pred_fallthru
          _
        // Predicated region
        $region49: #{tpu_custom_call.1} parent=27 // pred_check
          %p459 = pneg %p193
        $region50: #{tpu_custom_call.1} parent=27 // pred_check_branch
          %461 = sbr.rel (%p459) target = $region52
        $region51: #{tpu_custom_call.1} parent=27 // pred_region
          %p462 = scmp.lt.s32.totalorder %s31, 3
          %s463 = scalar_select %p462, %s31, 3
          %s464 = smul.addr %s463, 4
          %s465 = smul.addr %s464, 4
          %s466 = scalar_lea.vmem %s5, %s465
        $region52: #{tpu_custom_call.1} parent=27 // pred_fallthru
          _
        // Predicated region
        $region53: #{tpu_custom_call.1} parent=27 // pred_check
          %p467 = pneg %p219
        $region54: #{tpu_custom_call.1} parent=27 // pred_check_branch
          %469 = sbr.rel (%p467) target = $region56
        $region55: #{tpu_custom_call.1} parent=27 // pred_region
          %p470 = scmp.lt.s32.totalorder %s31, 3
          %s471 = scalar_select %p470, %s31, 3
          %s472 = scalar_lea.vmem %s6, %s471
        $region56: #{tpu_custom_call.1} parent=27 // pred_fallthru
          _
        // Predicated region
        $region57: #{tpu_custom_call.1} parent=27 // pred_check
          %p473 = pneg %p245
        $region58: #{tpu_custom_call.1} parent=27 // pred_check_branch
          %475 = sbr.rel (%p473) target = $region60
        $region59: #{tpu_custom_call.1} parent=27 // pred_region
          %p476 = scmp.lt.s32.totalorder %s31, 3
          %s477 = scalar_select %p476, %s31, 3
          %s478 = smul.addr %s477, 4
          %s479 = smul.addr %s478, 4
          %s480 = scalar_lea.vmem %s7, %s479
        $region60: #{tpu_custom_call.1} parent=27 // pred_fallthru
          _
        // Predicated region
        $region61: #{tpu_custom_call.1} parent=27 // pred_check
          %p481 = pneg %p271
        $region62: #{tpu_custom_call.1} parent=27 // pred_check_branch
          %483 = sbr.rel (%p481) target = $region64
        $region63: #{tpu_custom_call.1} parent=27 // pred_region
          %p484 = scmp.lt.s32.totalorder %s31, 3
          %s485 = scalar_select %p484, %s31, 3
          %s486 = scalar_lea.vmem %s8, %s485
        $region64: #{tpu_custom_call.1} parent=27 // pred_fallthru
          _
        // Predicated region
        $region65: #{tpu_custom_call.1} parent=27 // pred_check
          %p487 = pneg %p297
        $region66: #{tpu_custom_call.1} parent=27 // pred_check_branch
          %489 = sbr.rel (%p487) target = $region68
        $region67: #{tpu_custom_call.1} parent=27 // pred_region
          %p490 = scmp.lt.s32.totalorder %s31, 3
          %s491 = scalar_select %p490, %s31, 3
          %s492 = smul.addr %s491, 4
          %s493 = scalar_lea.vmem %s9, %s492
        $region68: #{tpu_custom_call.1} parent=27 // pred_fallthru
          _
      $region28: #{tpu_custom_call.1} parent=5 // pred_fallthru
        _
      %p494 = scmp.le.s32.totalorder 1, %s22
      %p495 = scmp.lt.s32.totalorder %s22, 9
      %p496 = pnand %p494, %p495
      %p497 = pneg %p496
      // Predicated region
      $region69: #{tpu_custom_call.1} parent=5 // pred_check
        _
      $region70: #{tpu_custom_call.1} parent=5 // pred_check_branch
        %499 = sbr.rel (%p496) target = $region72
      $region71: #{tpu_custom_call.1} parent=5 // pred_region
        %s500 = ssub.s32 %s22, 1
        %p501 = scmp.lt.s32.totalorder %s32, 1
        %s502 = scalar_select %p501, %s32, 1
        %p503 = scmp.lt.s32.totalorder %s33, 0
        %s504 = scalar_select %p503, %s33, 0
        %s505 = sadd.s32 %s504, %s502
        %s506 = smul.addr %s505, 8
        %s507 = scalar_lea.vmem %s0, %s506
        %p508 = pneg %p69
        %p509 = pneg %p66
        %p510 = scmp.lt.s32.totalorder %s32, 1
        %s511 = scalar_select %p510, %s32, 1
        %s512 = smul.addr %s511, 8
        %s513 = scalar_lea.vmem %s1, %s512
        %p514 = pneg %p95
        %p515 = pneg %p92
        %p516 = scmp.lt.s32.totalorder %s32, 1
        %s517 = scalar_select %p516, %s32, 1
        %s518 = scalar_lea.vmem %s2, %s517
        %p519 = pneg %p121
        %p520 = pneg %p118
        %p521 = scmp.lt.s32.totalorder %s34, 3
        %s522 = scalar_select %p521, %s34, 3
        %s523 = smul.addr %s522, 4
        %s524 = smul.addr %s523, 4
        %s525 = scalar_lea.vmem %s3, %s524
        %p526 = pneg %p147
        %p527 = pneg %p144
        %p528 = scmp.lt.s32.totalorder %s34, 3
        %s529 = scalar_select %p528, %s34, 3
        %s530 = scalar_lea.vmem %s4, %s529
        %p531 = pneg %p173
        %p532 = pneg %p170
        %p533 = scmp.lt.s32.totalorder %s34, 3
        %s534 = scalar_select %p533, %s34, 3
        %s535 = smul.addr %s534, 4
        %s536 = smul.addr %s535, 4
        %s537 = scalar_lea.vmem %s5, %s536
        %p538 = pneg %p199
        %p539 = pneg %p196
        %p540 = scmp.lt.s32.totalorder %s34, 3
        %s541 = scalar_select %p540, %s34, 3
        %s542 = scalar_lea.vmem %s6, %s541
        %p543 = pneg %p225
        %p544 = pneg %p222
        %p545 = scmp.lt.s32.totalorder %s34, 3
        %s546 = scalar_select %p545, %s34, 3
        %s547 = smul.addr %s546, 4
        %s548 = smul.addr %s547, 4
        %s549 = scalar_lea.vmem %s7, %s548
        %p550 = pneg %p251
        %p551 = pneg %p248
        %p552 = scmp.lt.s32.totalorder %s34, 3
        %s553 = scalar_select %p552, %s34, 3
        %s554 = scalar_lea.vmem %s8, %s553
        %p555 = pneg %p277
        %p556 = pneg %p274
        %p557 = scmp.lt.s32.totalorder %s34, 3
        %s558 = scalar_select %p557, %s34, 3
        %s559 = smul.addr %s558, 4
        %s560 = scalar_lea.vmem %s9, %s559
        %p561 = pneg %p303
        %p562 = pneg %p300
        %p563 = pneg %p324
        %p564 = pneg %p321
        %p565 = pneg %p345
        %p566 = pneg %p342
        %p567 = pneg %p366
        %p568 = pneg %p363
        %p569 = pneg %p394
        %p570 = pneg %p391
        %s571 = sand.u32 %s381, 1
        %s572 = scalar_lea.sflag [#allocation4], %s571
        %s573 = sand.u32 %s381, 1
        %s574 = smul.addr %s573, 8
        %s575 = scalar_lea.vmem [#allocation3], %s574
        %p576 = scmp.lt.s32.totalorder %s32, 1
        %s577 = scalar_select %p576, %s32, 1
        %p578 = scmp.lt.s32.totalorder %s33, 0
        %s579 = scalar_select %p578, %s33, 0
        %s580 = sadd.s32 %s579, %s577
        %s581 = smul.addr %s580, 8
        %s582 = scalar_lea.vmem %s0, %s581
        %p583 = scmp.lt.s32.totalorder %s32, 1
        %s584 = scalar_select %p583, %s32, 1
        %s585 = smul.addr %s584, 8
        %s586 = scalar_lea.vmem %s1, %s585
        %p587 = scmp.lt.s32.totalorder %s32, 1
        %s588 = scalar_select %p587, %s32, 1
        %s589 = scalar_lea.vmem %s2, %s588
        %p590 = scmp.lt.s32.totalorder %s34, 3
        %s591 = scalar_select %p590, %s34, 3
        %s592 = smul.addr %s591, 4
        %s593 = smul.addr %s592, 4
        %s594 = scalar_lea.vmem %s3, %s593
        %p595 = scmp.lt.s32.totalorder %s34, 3
        %s596 = scalar_select %p595, %s34, 3
        %s597 = scalar_lea.vmem %s4, %s596
        %p598 = scmp.lt.s32.totalorder %s34, 3
        %s599 = scalar_select %p598, %s34, 3
        %s600 = smul.addr %s599, 4
        %s601 = smul.addr %s600, 4
        %s602 = scalar_lea.vmem %s5, %s601
        %p603 = scmp.lt.s32.totalorder %s34, 3
        %s604 = scalar_select %p603, %s34, 3
        %s605 = scalar_lea.vmem %s6, %s604
        %p606 = scmp.lt.s32.totalorder %s34, 3
        %s607 = scalar_select %p606, %s34, 3
        %s608 = smul.addr %s607, 4
        %s609 = smul.addr %s608, 4
        %s610 = scalar_lea.vmem %s7, %s609
        %p611 = scmp.lt.s32.totalorder %s34, 3
        %s612 = scalar_select %p611, %s34, 3
        %s613 = scalar_lea.vmem %s8, %s612
        %p614 = scmp.lt.s32.totalorder %s34, 3
        %s615 = scalar_select %p614, %s34, 3
        %s616 = smul.addr %s615, 4
        %s617 = scalar_lea.vmem %s9, %s616
        %p619 = scmp.eq.s32.totalorder %s34, 0
        // Predicated region
        $region73: #{tpu_custom_call.1} parent=71 // pred_check
          %p620 = pneg %p619
        $region74: #{tpu_custom_call.1} parent=71 // pred_check_branch
          %622 = sbr.rel (%p620) target = $region76
        $region75: #{tpu_custom_call.1} parent=71 // pred_region
          %vm623 = vcmask 261120
          %624 = vst.msk [vmem:[#allocation2] sm:$0xff] %vm623, 0.0
        $region76: #{tpu_custom_call.1} parent=71 // pred_fallthru
          _
        %v625 = vld [vmem:[%s582] sm:$0xff]
        %v626 = vpack.c.bf16 %v625, %v625
        %v627 = vld [vmem:[%s586] sm:$0xff]
        %v628 = vpack.c.bf16 %v627, %v627
        %v629 = vld [vmem:[%s594] sm:$0xf]
        %v630 = vld [vmem:[%s594 + $0x4] sm:$0xf]
        %v631 = vld [vmem:[%s594 + $0x8] sm:$0xf]
        %v632 = vld [vmem:[%s594 + $0xc] sm:$0xf]
        %v633 = vld [vmem:[%s597] sm:$0x1]
        %v635 = vlaneseq
        %v636 = vshrl.u32 %v635, 7
        %v637 = vsub.s32 0, %v636
        %v638 = vrot.slane %v633, %v637
        %v644 = vunpack.c.l.b16 %v629
        %v645 = vunpack.c.l.b16 %v630
        %v646 = vunpack.c.l.b16 %v631
        %v647 = vunpack.c.l.b16 %v632
        %v648 = vpack.c.b16 %v645, %v644
        %v649 = vpack.c.b16 %v647, %v646
        %vm652 = vcmask 261120
        %v654 = vsel %vm652, %v626, 0
        %656 = vmatprep.subr.bf16.mxu0 0
        %657 = vmatpush1.bf16.msra.mxu0 %v648
        %658 = vmatprep.subr.bf16.mxu0 0
        %659 = vmatpush1.bf16.msra.mxu0 %v649
        %660 = vmatprep.subr.bf16.mxu0 0
        %661 = vmatpush1.bf16.msra.mxu0 0
        %662 = vmatprep.subr.bf16.mxu0 0
        %663 = vmatpush1.bf16.msra.mxu0 0
        %664 = vmatprep.subr.bf16.mxu0 0
        %665 = vmatpush1.bf16.msra.mxu0 0
        %666 = vmatprep.subr.bf16.mxu0 0
        %667 = vmatpush1.bf16.msra.mxu0 0
        %668 = vmatprep.subr.bf16.mxu0 0
        %669 = vmatpush1.bf16.msra.mxu0 0
        %670 = vmatprep.subr.bf16.mxu0 0
        %671 = vmatpush1.bf16.msra.mxu0 0
        %672 = vmatprep.subr.bf16.mxu0 0
        %673 = vmatpush1.bf16.msra.mxu0 0
        %674 = vmatprep.subr.bf16.mxu0 0
        %675 = vmatpush1.bf16.msra.mxu0 0
        %676 = vmatprep.subr.bf16.mxu0 0
        %677 = vmatpush1.bf16.msra.mxu0 0
        %678 = vmatprep.subr.bf16.mxu0 0
        %679 = vmatpush1.bf16.msra.mxu0 0
        %680 = vmatprep.subr.bf16.mxu0 0
        %681 = vmatpush1.bf16.msra.mxu0 0
        %682 = vmatprep.subr.bf16.mxu0 0
        %683 = vmatpush1.bf16.msra.mxu0 0
        %684 = vmatprep.subr.bf16.mxu0 0
        %685 = vmatpush1.bf16.msra.mxu0 0
        %686 = vmatprep.subr.bf16.mxu0 0
        %687 = vmatpush1.bf16.msra.mxu0 0
        %688 = vmatprep.mubr.bf16.mxu0 0
        %689 = vmatmul.mubr.bf16.gmra.mrb[0].mxu0 %v654
        %v690 = vpop.f32.mrb[0].mxu0
        %v691 = vadd.f32 %v638, %v690
        %v692 = vpop.f32.mrb[0].mxu0
        %v693 = vpop.f32.mrb[0].mxu0
        %v694 = vpop.f32.mrb[0].mxu0
        %695 = vdwg.mxu0
        %v696 = vmul.f32 %v691, 0.35355338
        %v697 = vld [vmem:[%s602] sm:$0xf]
        %v698 = vld [vmem:[%s602 + $0x4] sm:$0xf]
        %v699 = vld [vmem:[%s602 + $0x8] sm:$0xf]
        %v700 = vld [vmem:[%s602 + $0xc] sm:$0xf]
        %v701 = vld [vmem:[%s605] sm:$0x1]
        %v703 = vlaneseq
        %v704 = vshrl.u32 %v703, 7
        %v705 = vsub.s32 0, %v704
        %v706 = vrot.slane %v701, %v705
        %v712 = vunpack.c.l.b16 %v697
        %v713 = vunpack.c.l.b16 %v698
        %v714 = vunpack.c.l.b16 %v699
        %v715 = vunpack.c.l.b16 %v700
        %v716 = vpack.c.b16 %v713, %v712
        %v717 = vpack.c.b16 %v715, %v714
        %v721 = vsel %vm652, %v628, 0
        %723 = vmatprep.subr.bf16.mxu0 0
        %724 = vmatpush1.bf16.msra.mxu0 %v716
        %725 = vmatprep.subr.bf16.mxu0 0
        %726 = vmatpush1.bf16.msra.mxu0 %v717
        %727 = vmatprep.subr.bf16.mxu0 0
        %728 = vmatpush1.bf16.msra.mxu0 0
        %729 = vmatprep.subr.bf16.mxu0 0
        %730 = vmatpush1.bf16.msra.mxu0 0
        %731 = vmatprep.subr.bf16.mxu0 0
        %732 = vmatpush1.bf16.msra.mxu0 0
        %733 = vmatprep.subr.bf16.mxu0 0
        %734 = vmatpush1.bf16.msra.mxu0 0
        %735 = vmatprep.subr.bf16.mxu0 0
        %736 = vmatpush1.bf16.msra.mxu0 0
        %737 = vmatprep.subr.bf16.mxu0 0
        %738 = vmatpush1.bf16.msra.mxu0 0
        %739 = vmatprep.subr.bf16.mxu0 0
        %740 = vmatpush1.bf16.msra.mxu0 0
        %741 = vmatprep.subr.bf16.mxu0 0
        %742 = vmatpush1.bf16.msra.mxu0 0
        %743 = vmatprep.subr.bf16.mxu0 0
        %744 = vmatpush1.bf16.msra.mxu0 0
        %745 = vmatprep.subr.bf16.mxu0 0
        %746 = vmatpush1.bf16.msra.mxu0 0
        %747 = vmatprep.subr.bf16.mxu0 0
        %748 = vmatpush1.bf16.msra.mxu0 0
        %749 = vmatprep.subr.bf16.mxu0 0
        %750 = vmatpush1.bf16.msra.mxu0 0
        %751 = vmatprep.subr.bf16.mxu0 0
        %752 = vmatpush1.bf16.msra.mxu0 0
        %753 = vmatprep.subr.bf16.mxu0 0
        %754 = vmatpush1.bf16.msra.mxu0 0
        %755 = vmatprep.mubr.bf16.mxu0 0
        %756 = vmatmul.mubr.bf16.gmra.mrb[0].mxu0 %v721
        %v757 = vpop.f32.mrb[0].mxu0
        %v758 = vadd.f32 %v706, %v757
        %v759 = vpop.f32.mrb[0].mxu0
        %v760 = vpop.f32.mrb[0].mxu0
        %v761 = vpop.f32.mrb[0].mxu0
        %762 = vdwg.mxu0
        %v763 = vld [vmem:[%s610] sm:$0xf]
        %v764 = vld [vmem:[%s610 + $0x4] sm:$0xf]
        %v765 = vld [vmem:[%s610 + $0x8] sm:$0xf]
        %v766 = vld [vmem:[%s610 + $0xc] sm:$0xf]
        %v767 = vld [vmem:[%s613] sm:$0x1]
        %v769 = vlaneseq
        %v770 = vshrl.u32 %v769, 7
        %v771 = vsub.s32 0, %v770
        %v772 = vrot.slane %v767, %v771
        %v778 = vunpack.c.l.b16 %v763
        %v779 = vunpack.c.l.b16 %v764
        %v780 = vunpack.c.l.b16 %v765
        %v781 = vunpack.c.l.b16 %v766
        %v782 = vpack.c.b16 %v779, %v778
        %v783 = vpack.c.b16 %v781, %v780
        %786 = vmatprep.subr.bf16.mxu0 0
        %787 = vmatpush1.bf16.msra.mxu0 %v782
        %788 = vmatprep.subr.bf16.mxu0 0
        %789 = vmatpush1.bf16.msra.mxu0 %v783
        %790 = vmatprep.subr.bf16.mxu0 0
        %791 = vmatpush1.bf16.msra.mxu0 0
        %792 = vmatprep.subr.bf16.mxu0 0
        %793 = vmatpush1.bf16.msra.mxu0 0
        %794 = vmatprep.subr.bf16.mxu0 0
        %795 = vmatpush1.bf16.msra.mxu0 0
        %796 = vmatprep.subr.bf16.mxu0 0
        %797 = vmatpush1.bf16.msra.mxu0 0
        %798 = vmatprep.subr.bf16.mxu0 0
        %799 = vmatpush1.bf16.msra.mxu0 0
        %800 = vmatprep.subr.bf16.mxu0 0
        %801 = vmatpush1.bf16.msra.mxu0 0
        %802 = vmatprep.subr.bf16.mxu0 0
        %803 = vmatpush1.bf16.msra.mxu0 0
        %804 = vmatprep.subr.bf16.mxu0 0
        %805 = vmatpush1.bf16.msra.mxu0 0
        %806 = vmatprep.subr.bf16.mxu0 0
        %807 = vmatpush1.bf16.msra.mxu0 0
        %808 = vmatprep.subr.bf16.mxu0 0
        %809 = vmatpush1.bf16.msra.mxu0 0
        %810 = vmatprep.subr.bf16.mxu0 0
        %811 = vmatpush1.bf16.msra.mxu0 0
        %812 = vmatprep.subr.bf16.mxu0 0
        %813 = vmatpush1.bf16.msra.mxu0 0
        %814 = vmatprep.subr.bf16.mxu0 0
        %815 = vmatpush1.bf16.msra.mxu0 0
        %816 = vmatprep.subr.bf16.mxu0 0
        %817 = vmatpush1.bf16.msra.mxu0 0
        %818 = vmatprep.mubr.bf16.mxu0 0
        %819 = vmatmul.mubr.bf16.gmra.mrb[0].mxu0 %v721
        %v820 = vpop.f32.mrb[0].mxu0
        %v821 = vadd.f32 %v772, %v820
        %v822 = vpop.f32.mrb[0].mxu0
        %v823 = vpop.f32.mrb[0].mxu0
        %v824 = vpop.f32.mrb[0].mxu0
        %825 = vdwg.mxu0
        %v826 = vld [vmem:[%s589] sm:$0x1]
        %v827 = vsub.f32 1.0, %v826
        %v828 = vmul.f32 %v827, -10000.0
        %v829 = vpack.c.bf16 %v696, %v696
        %v830 = vpack.c.bf16 %v758, %v758
        %v832 = vlaneseq
        %v833 = vshrl.u32 %v832, 7
        %v834 = vsub.s32 0, %v833
        %v835 = vrot.slane %v828, %v834
        %vm837 = vcmask 64512
        %v839 = vsel %vm837, %v829, 0
        %v842 = vsel %vm837, %v830, 0
        %844 = vmatprep.subr.bf16.mxu0 0
        %845 = vmatpush1.bf16.xpose.msra.mxu0 %v842
        %846 = vmatprep.subr.bf16.mxu0 0
        %847 = vmatpush1.bf16.xpose.msra.mxu0 0
        %848 = vmatprep.subr.bf16.mxu0 0
        %849 = vmatpush1.bf16.xpose.msra.mxu0 0
        %850 = vmatprep.subr.bf16.mxu0 0
        %851 = vmatpush1.bf16.xpose.msra.mxu0 0
        %852 = vmatprep.subr.bf16.mxu0 0
        %853 = vmatpush1.bf16.xpose.msra.mxu0 0
        %854 = vmatprep.subr.bf16.mxu0 0
        %855 = vmatpush1.bf16.xpose.msra.mxu0 0
        %856 = vmatprep.subr.bf16.mxu0 0
        %857 = vmatpush1.bf16.xpose.msra.mxu0 0
        %858 = vmatprep.subr.bf16.mxu0 0
        %859 = vmatpush1.bf16.xpose.msra.mxu0 0
        %860 = vmatprep.subr.bf16.mxu0 0
        %861 = vmatpush1.bf16.xpose.msra.mxu0 0
        %862 = vmatprep.subr.bf16.mxu0 0
        %863 = vmatpush1.bf16.xpose.msra.mxu0 0
        %864 = vmatprep.subr.bf16.mxu0 0
        %865 = vmatpush1.bf16.xpose.msra.mxu0 0
        %866 = vmatprep.subr.bf16.mxu0 0
        %867 = vmatpush1.bf16.xpose.msra.mxu0 0
        %868 = vmatprep.subr.bf16.mxu0 0
        %869 = vmatpush1.bf16.xpose.msra.mxu0 0
        %870 = vmatprep.subr.bf16.mxu0 0
        %871 = vmatpush1.bf16.xpose.msra.mxu0 0
        %872 = vmatprep.subr.bf16.mxu0 0
        %873 = vmatpush1.bf16.xpose.msra.mxu0 0
        %874 = vmatprep.subr.bf16.mxu0 0
        %875 = vmatpush1.bf16.xpose.msra.mxu0 0
        %876 = vmatprep.mubr.bf16.mxu0 0
        %877 = vmatmul.mubr.bf16.gmra.mrb[0].mxu0 %v839
        %v878 = vpop.f32.mrb[0].mxu0
        %v879 = vadd.f32 %v835, %v878
        %v880 = vpop.f32.mrb[0].mxu0
        %v881 = vpop.f32.mrb[0].mxu0
        %v882 = vpop.f32.mrb[0].mxu0
        %883 = vdwg.mxu0
        %v884 = vsel %vm837, %v879, -inf
        %885 = vmax.xlane.f32.xlu0 %v884
        %v886 = vpop.xlane.xlu0 %885
        %v887 = vsub.f32 %v879, %v886
        %v888 = vmul.f32 %v887, 1.442695
        %v889 = vpow.pop %v888
        %v890 = vsel %vm837, %v889, 0.0
        %891 = vadd.xlane.f32.xlu0 %v890
        %v892 = vpop.xlane.xlu0 %891
        %v893 = vrcp.pop %v892
        %v894 = vmul.f32 %v889, %v893
        %v895 = vpack.c.bf16 %v894, %v894
        %v896 = vpack.c.bf16 %v821, %v821
        %v898 = vsel %vm837, %v895, 0
        %vm900 = vcmask 1043456
        %v902 = vsel %vm900, %v896, 0
        %904 = vmatprep.subr.bf16.mxu0 0
        %905 = vmatpush1.bf16.msra.mxu0 %v902
        %906 = vmatprep.subr.bf16.mxu0 0
        %907 = vmatpush1.bf16.msra.mxu0 0
        %908 = vmatprep.subr.bf16.mxu0 0
        %909 = vmatpush1.bf16.msra.mxu0 0
        %910 = vmatprep.subr.bf16.mxu0 0
        %911 = vmatpush1.bf16.msra.mxu0 0
        %912 = vmatprep.subr.bf16.mxu0 0
        %913 = vmatpush1.bf16.msra.mxu0 0
        %914 = vmatprep.subr.bf16.mxu0 0
        %915 = vmatpush1.bf16.msra.mxu0 0
        %916 = vmatprep.subr.bf16.mxu0 0
        %917 = vmatpush1.bf16.msra.mxu0 0
        %918 = vmatprep.subr.bf16.mxu0 0
        %919 = vmatpush1.bf16.msra.mxu0 0
        %920 = vmatprep.subr.bf16.mxu0 0
        %921 = vmatpush1.bf16.msra.mxu0 0
        %922 = vmatprep.subr.bf16.mxu0 0
        %923 = vmatpush1.bf16.msra.mxu0 0
        %924 = vmatprep.subr.bf16.mxu0 0
        %925 = vmatpush1.bf16.msra.mxu0 0
        %926 = vmatprep.subr.bf16.mxu0 0
        %927 = vmatpush1.bf16.msra.mxu0 0
        %928 = vmatprep.subr.bf16.mxu0 0
        %929 = vmatpush1.bf16.msra.mxu0 0
        %930 = vmatprep.subr.bf16.mxu0 0
        %931 = vmatpush1.bf16.msra.mxu0 0
        %932 = vmatprep.subr.bf16.mxu0 0
        %933 = vmatpush1.bf16.msra.mxu0 0
        %934 = vmatprep.subr.bf16.mxu0 0
        %935 = vmatpush1.bf16.msra.mxu0 0
        %936 = vmatprep.mubr.bf16.mxu0 0
        %937 = vmatmul.mubr.bf16.gmra.mrb[0].mxu0 %v898
        %v938 = vpop.f32.mrb[0].mxu0
        %v939 = vadd.f32 0.0, %v938
        %v940 = vpop.f32.mrb[0].mxu0
        %v941 = vpop.f32.mrb[0].mxu0
        %v942 = vpop.f32.mrb[0].mxu0
        %943 = vdwg.mxu0
        %v944 = vld [vmem:[#allocation2] sm:$0xff]
        %v945 = vpack.c.bf16 %v939, %v939
        %v946 = vld [vmem:[%s617] sm:$0xf]
        %v948 = vsel %vm837, %v945, 0
        %v951 = vsel %vm900, %v946, 0
        %953 = vmatprep.subr.bf16.mxu0 0
        %954 = vmatpush1.bf16.msra.mxu0 %v951
        %955 = vmatprep.subr.bf16.mxu0 0
        %956 = vmatpush1.bf16.msra.mxu0 0
        %957 = vmatprep.subr.bf16.mxu0 0
        %958 = vmatpush1.bf16.msra.mxu0 0
        %959 = vmatprep.subr.bf16.mxu0 0
        %960 = vmatpush1.bf16.msra.mxu0 0
        %961 = vmatprep.subr.bf16.mxu0 0
        %962 = vmatpush1.bf16.msra.mxu0 0
        %963 = vmatprep.subr.bf16.mxu0 0
        %964 = vmatpush1.bf16.msra.mxu0 0
        %965 = vmatprep.subr.bf16.mxu0 0
        %966 = vmatpush1.bf16.msra.mxu0 0
        %967 = vmatprep.subr.bf16.mxu0 0
        %968 = vmatpush1.bf16.msra.mxu0 0
        %969 = vmatprep.subr.bf16.mxu0 0
        %970 = vmatpush1.bf16.msra.mxu0 0
        %971 = vmatprep.subr.bf16.mxu0 0
        %972 = vmatpush1.bf16.msra.mxu0 0
        %973 = vmatprep.subr.bf16.mxu0 0
        %974 = vmatpush1.bf16.msra.mxu0 0
        %975 = vmatprep.subr.bf16.mxu0 0
        %976 = vmatpush1.bf16.msra.mxu0 0
        %977 = vmatprep.subr.bf16.mxu0 0
        %978 = vmatpush1.bf16.msra.mxu0 0
        %979 = vmatprep.subr.bf16.mxu0 0
        %980 = vmatpush1.bf16.msra.mxu0 0
        %981 = vmatprep.subr.bf16.mxu0 0
        %982 = vmatpush1.bf16.msra.mxu0 0
        %983 = vmatprep.subr.bf16.mxu0 0
        %984 = vmatpush1.bf16.msra.mxu0 0
        %985 = vmatprep.mubr.bf16.mxu0 0
        %986 = vmatmul.mubr.bf16.gmra.mrb[0].mxu0 %v948
        %v987 = vpop.f32.mrb[0].mxu0
        %v988 = vadd.f32 0.0, %v987
        %v989 = vpop.f32.mrb[0].mxu0
        %v990 = vpop.f32.mrb[0].mxu0
        %v991 = vpop.f32.mrb[0].mxu0
        %992 = vdwg.mxu0
        %v993 = vadd.f32 %v944, %v988
        %994 = vst.msk [vmem:[#allocation2] sm:$0xff] %vm652, %v993
        %p995 = scmp.eq.s32.totalorder %s34, 3
        // Predicated region
        $region77: #{tpu_custom_call.1} parent=71 // pred_check
          %p996 = pneg %p995
        $region78: #{tpu_custom_call.1} parent=71 // pred_check_branch
          %998 = sbr.rel (%p996) target = $region80
        $region79: #{tpu_custom_call.1} parent=71 // pred_region
          %v999 = vld [vmem:[#allocation2] sm:$0xff]
          %v1000 = vld [vmem:[%s10] sm:$0x1]
          %v1002 = vlaneseq
          %v1003 = vshrl.u32 %v1002, 7
          %v1004 = vsub.s32 0, %v1003
          %v1005 = vrot.slane %v1000, %v1004
          %v1007 = vadd.f32 %v999, %v1005
          %v1008 = vadd.f32 %v1007, %v625
          %v1009 = vsel %vm652, %v1008, 0.0
          %1010 = vadd.xlane.f32.xlu0 %v1009
          %v1011 = vpop.xlane.xlu0 %1010
          %v1012 = vrcp.pop 32.0
          %v1013 = vmul.f32 %v1011, %v1012
          %v1014 = vsub.f32 %v1008, %v1013
          %v1015 = vmul.f32 %v1014, %v1014
          %v1016 = vsel %vm652, %v1015, 0.0
          %1017 = vadd.xlane.f32.xlu0 %v1016
          %v1018 = vpop.xlane.xlu0 %1017
          %v1019 = vmul.f32 %v1018, %v1012
          %v1020 = vadd.f32 %v1019, 1e-05
          %v1021 = vrsqrt.pop %v1020
          %v1022 = vmul.f32 %v1014, %v1021
          %v1023 = vld [vmem:[%s11] sm:$0x1]
          %v1025 = vlaneseq
          %v1026 = vshrl.u32 %v1025, 7
          %v1027 = vsub.s32 0, %v1026
          %v1028 = vrot.slane %v1023, %v1027
          %v1030 = vmul.f32 %v1022, %v1028
          %v1031 = vld [vmem:[%s12] sm:$0x1]
          %v1033 = vlaneseq
          %v1034 = vshrl.u32 %v1033, 7
          %v1035 = vsub.s32 0, %v1034
          %v1036 = vrot.slane %v1031, %v1035
          %v1038 = vadd.f32 %v1030, %v1036
          %1039 = vst.msk [vmem:[%s575] sm:$0xff] %vm652, %v1038
        $region80: #{tpu_custom_call.1} parent=71 // pred_fallthru
          _
        %s1040 = sand.u32 %s381, 1
        %s1041 = scalar_lea.sflag [#allocation4], %s1040
        %s1042 = sand.u32 %s381, 1
        %s1043 = smul.addr %s1042, 8
        %s1044 = scalar_lea.vmem [#allocation3], %s1043
        // Predicated region
        $region81: #{tpu_custom_call.1} parent=71 // pred_check
          %p1045 = pneg %p391
        $region82: #{tpu_custom_call.1} parent=71 // pred_check_branch
          %1047 = sbr.rel (%p1045) target = $region84
        $region83: #{tpu_custom_call.1} parent=71 // pred_region
          %s1049 = ssub.s32 128, 128
          %1050 = vsyncadd %s1041, %s1049
          %s1051 = sadd.s32 %s33, %s32
          %s1052 = smul.addr %s1051, 128
          %s1053 = scalar_lea.hbm %s13, %s1052
          %s1055 = sshll.u32 %s1044, 4
          %s1056 = int_to_ptr.vmem [resolvable:$true] %s1055
          %1058 = dma.vmem_to_hbm [thread:$0]  %s1056, 128, %s1053, %s1041
        $region84: #{tpu_custom_call.1} parent=71 // pred_fallthru
          _
      $region72: #{tpu_custom_call.1} parent=5 // pred_fallthru
        _
      %p1059 = scmp.le.s32.totalorder 2, %s22
      // Predicated region
      $region85: #{tpu_custom_call.1} parent=5 // pred_check
        %p1060 = pneg %p1059
      $region86: #{tpu_custom_call.1} parent=5 // pred_check_branch
        %1062 = sbr.rel (%p1060) target = $region88
      $region87: #{tpu_custom_call.1} parent=5 // pred_region
        %s1063 = ssub.s32 %s22, 2
        // Predicated region
        $region89: #{tpu_custom_call.1} parent=87 // pred_check
          %p1064 = pneg %p397
        $region90: #{tpu_custom_call.1} parent=87 // pred_check_branch
          %1066 = sbr.rel (%p1064) target = $region92
        $region91: #{tpu_custom_call.1} parent=87 // pred_region
          %s1067 = sand.u32 %s382, 1
          %s1068 = scalar_lea.sflag [#allocation4], %s1067
          %s1069 = sand.u32 %s382, 1
          %s1070 = smul.addr %s1069, 8
          %s1071 = scalar_lea.vmem [#allocation3], %s1070
          %1072 = dma.done %s1068, 128
        $region92: #{tpu_custom_call.1} parent=87 // pred_fallthru
          _
      $region88: #{tpu_custom_call.1} parent=5 // pred_fallthru
        _
    $region6: #{tpu_custom_call.1} parent=1 // loop_footer
      %s26 = sadd.s32 1, %s22
    $region7: #{tpu_custom_call.1} parent=1 // loop_footer_branch
      %21 = sbr.rel target = $region3
    $region8: #{tpu_custom_call.1} parent=1 // loop_exit
      _
    %1073 = vsyncpa [#allocation4], 1
    %s1074 = scalar_lea.sflag [#allocation4], 1
    %1075 = vsyncpa %s1074, 1

</llo_original>
